<compile_context>
chip_gen: v7x
topology: tpu7x:2x2x1
jax: 0.10.0
libtpu: 0.0.40
codegen_flags: <defaults>
</compile_context>

<pallas_src>
import functools

import jax
import jax.numpy as jnp
from jax.experimental import pallas as pl
from jax.experimental.pallas import tpu as pltpu


def _round_up(x: int, m: int) -> int:
    return ((x + m - 1) // m) * m


def _inner_product_decoder_kernel(a_ref, b_ref, o_ref, *, compute_dtype):
    """One (tm, tn) output tile of Z @ Z.T.

    a_ref : (tm, D)  -- row tile of Z
    b_ref : (tn, D)  -- row tile of Z (acts as columns of Z.T)
    o_ref : (tm, tn) -- output tile
    """
    a = a_ref[...]
    b = b_ref[...]
    if compute_dtype is not None:
        # Narrow MXU operands (e.g. bf16): halves input DMA and MXU passes;
        # accumulation below stays f32.
        a = a.astype(compute_dtype)
        b = b.astype(compute_dtype)
    # act = identity; dropout is identity in eval mode.
    o_ref[...] = jax.lax.dot_general(
        a, b,
        dimension_numbers=(((1,), (1,)), ((), ())),  # (tm,D) . (tn,D)^T -> (tm,tn)
        preferred_element_type=jnp.float32,
    ).astype(o_ref.dtype)


def _choose_tiles(N: int, tm: int, tn: int) -> tuple[int, int]:
    # Lane (last) tile dim: multiple of 128; sublane tile dim: multiple of 8.
    tn = min(tn, _round_up(N, 128))
    tm = min(tm, _round_up(N, 8))
    # Keep at least one parallel grid axis with >= 2 tiles so both v7x
    # TensorCores get work (prefer splitting rows so tn stays lane-dense).
    if pl.cdiv(N, tm) < 2 and pl.cdiv(N, tn) < 2 and N > 8:
        tm = max(8, _round_up(pl.cdiv(N, 2), 8))
    return tm, tn


def inner_product_decoder(inputs, *, dropout: float = 0.0, training: bool = False,
                          tm: int = 512, tn: int = 2048,
                          out_dtype=None, compute_dtype=None):
    """JAX wrapper: Z @ Z.T via a Pallas kernel, tiled over (rows, cols).

    `dropout`/`training` mirror the PyTorch module; only eval semantics
    (identity dropout) are implemented.
    `out_dtype` lets callers request e.g. bf16 output; `compute_dtype` casts
    the MXU operands (recommended bf16 on v5e).  f32 MXU accumulation always.
    """
    if training and dropout > 0.0:
        # TODO(synk): training-mode dropout (pltpu.prng_random_bits mask) not implemented.
        raise NotImplementedError("inner_product_decoder: training-mode dropout not supported")

    N, D = inputs.shape
    out_dtype = inputs.dtype if out_dtype is None else out_dtype
    tm, tn = _choose_tiles(N, tm, tn)

    grid = (pl.cdiv(N, tm), pl.cdiv(N, tn))

    # Derive the VMEM limit from the actual (double-buffered) tile footprint;
    # cap below 64 MiB so v7x keeps headroom for compiler-internal scratch.
    in_bytes = jnp.dtype(inputs.dtype).itemsize
    out_bytes = jnp.dtype(out_dtype).itemsize
    vmem_bytes = 2 * (tm * D * in_bytes + tn * D * in_bytes + tm * tn * out_bytes)
    vmem_limit = min(48 * 1024 * 1024, vmem_bytes + 8 * 1024 * 1024)

    kernel = functools.partial(_inner_product_decoder_kernel,
                               compute_dtype=compute_dtype)

    return pl.pallas_call(
        kernel,
        out_shape=jax.ShapeDtypeStruct((N, N), out_dtype),
        grid_spec=pltpu.PrefetchScalarGridSpec(
            num_scalar_prefetch=0,
            grid=grid,
            in_specs=[
                # row tile of Z: changes only with i (reused across inner j loop)
                pl.BlockSpec((tm, D), lambda i, j: (i, 0)),
                # "column" tile: same array, indexed by j, contracted on D
                pl.BlockSpec((tn, D), lambda i, j: (j, 0)),
            ],
            out_specs=pl.BlockSpec((tm, tn), lambda i, j: (i, j)),
        ),
        compiler_params=pltpu.CompilerParams(
            # Independent output tiles on both axes (D fits in one block, so
            # there is no reduction axis) -> megacore sharding.
            dimension_semantics=("parallel", "parallel"),
            vmem_limit_bytes=vmem_limit,
        ),
    )(inputs, inputs)


if __name__ == "__main__":
    # Small deterministic example: 200 nodes (deliberately NOT a multiple of
    # any tile, to exercise partial edge blocks), 32-dim latent embeddings.
    key = jax.random.PRNGKey(0)
    N, D = 200, 32
    z = jax.random.normal(key, (N, D), dtype=jnp.float32)

    ref = z @ z.T

    # f32 path (matches the PyTorch reference numerics).
    out = inner_product_decoder(z, dropout=0.0)
    out = jax.block_until_ready(out)
    assert out.shape == (N, N)
    assert out.dtype == jnp.float32
    assert jnp.allclose(out, ref, atol=1e-4, rtol=1e-4), "f32 mismatch vs reference"

    # Narrow (bf16) path: recommended for production (HBM-write-bound kernel).
    out_bf16 = inner_product_decoder(z, dropout=0.0,
                                     out_dtype=jnp.bfloat16,
                                     compute_dtype=jnp.bfloat16)
    out_bf16 = jax.block_until_ready(out_bf16)
    assert out_bf16.shape == (N, N)
    assert out_bf16.dtype == jnp.bfloat16
    assert jnp.allclose(out_bf16.astype(jnp.float32), ref, atol=0.5, rtol=2e-2), \
        "bf16 mismatch vs reference"

    print("KERNEL_OK")
</pallas_src>

<mosaic_0001>
module attributes {stable_mosaic.version = 11 : i64} {
  func.func @_inner_product_decoder_kernel(%arg0: i32, %arg1: i32, %arg2: memref<104x32xf32, #tpu.memory_space<vmem>>, %arg3: memref<256x32xf32, #tpu.memory_space<vmem>>, %arg4: memref<104x256xf32, #tpu.memory_space<vmem>>) attributes {dimension_semantics = [#tpu.dimension_semantics<parallel>, #tpu.dimension_semantics<parallel>], iteration_bounds = array<i64: 2, 1>, scalar_prefetch = 0 : i64, scratch_operands = 0 : i64, tpu.core_type = #tpu.core_type<tc>, window_params = [{transform_indices = @transform_0, window_bounds = array<i64: 104, 32>}, {transform_indices = @transform_1, window_bounds = array<i64: 256, 32>}, {transform_indices = @transform_2, window_bounds = array<i64: 104, 256>}]} {
    %c0 = arith.constant 0 : index
    %c0_0 = arith.constant 0 : index
    %0 = vector.load %arg2[%c0, %c0_0] : memref<104x32xf32, #tpu.memory_space<vmem>>, vector<104x32xf32>
    %c0_1 = arith.constant 0 : index
    %c0_2 = arith.constant 0 : index
    %1 = vector.load %arg3[%c0_1, %c0_2] : memref<256x32xf32, #tpu.memory_space<vmem>>, vector<256x32xf32>
    %cst = arith.constant dense<0.000000e+00> : vector<104x256xf32>
    %2 = tpu.matmul %0, %1, %cst {dimension_numbers = #tpu.dot_dimension_numbers<[1], [1], [0], [0], [0, 0, 1, 0], [], []>} : vector<104x32xf32>, vector<256x32xf32>, vector<104x256xf32> -> vector<104x256xf32>
    %c0_3 = arith.constant 0 : index
    %c0_4 = arith.constant 0 : index
    %3 = vector.load %arg4[%c0_3, %c0_4] : memref<104x256xf32, #tpu.memory_space<vmem>>, vector<104x256xf32>
    tpu.vector_store %arg4[%c0_3, %c0_4], %2 {strides = array<i32>} : memref<104x256xf32, #tpu.memory_space<vmem>>, vector<104x256xf32>,
    return
  }
  func.func @transform_0(%arg0: i32, %arg1: i32) -> (i32, i32) {
    %c0_i32 = arith.constant 0 : i32
    %c0_i32_0 = arith.constant 0 : i32
    return %arg0, %c0_i32 : i32, i32
  }
  func.func @transform_1(%arg0: i32, %arg1: i32) -> (i32, i32) {
    %c0_i32 = arith.constant 0 : i32
    %c0_i32_0 = arith.constant 0 : i32
    return %arg1, %c0_i32 : i32, i32
  }
  func.func @transform_2(%arg0: i32, %arg1: i32) -> (i32, i32) {
    %c0_i32 = arith.constant 0 : i32
    return %arg0, %arg1 : i32, i32
  }
}

</mosaic_0001>

<llo_original>
// kernel: tpu_custom_call.1
$region0: #{tpu_custom_call.1}
  #allocation0 [shape = 'u32[]', space=smem, size = 0x4, offset = 0x4, fixed_abs, tag = 'smem constant byte address 0x4 - core index']
  #allocation1 [shape = 'u32[144,128]{1,0:T(1,128)}', space=vmem, size = 0x12000, scoped, tag = 'internal scratch']
  %s0 = inlined_call_operand.vmem [shape: f32[200,32], index: 0, kind: input, shape index: {}]
  %s1 = inlined_call_operand.vmem [shape: f32[200,32], index: 1, kind: input, shape index: {}]
  %s2 = inlined_call_operand.hbm [shape: f32[200,200], index: 2, kind: output, shape index: {}]
  %s3 = sld [smem:[#allocation0]]
  $region41: #{tpu_custom_call.1} parent=0
    _
  %s5 = ssub.s32 1, %s3
  %s6 = scalar_select 0, %s5, %s3
  $region1: #{tpu_custom_call.1} parent=0
    #allocation2 [shape = 'u8[212992]{0}', space=vmem, size = 0x34000, scoped, tag = 'output window, operand 0']
    #allocation3 [shape = 's32[2]{0}', space=sflag, size = 0x8, scoped, tag = 'scoped memory for tpu_custom_call.1']
    %7 = vsyncpa [#allocation3], 0
    %s8 = scalar_lea.sflag [#allocation3], 1
    %9 = vsyncpa %s8, 0
    loop: start=0, step=1, limit=4
    $region2: #{tpu_custom_call.1} parent=1 // loop_pre_header
      _
    $region3: #{tpu_custom_call.1} parent=1 // loop_header
      %s11 = sphi 0, %s15
      %p12 = scmp.ge.s32.totalorder %s11, 4
      %s18 = sphi 0, %s30
      %s19 = sphi 0, %s26
      %s20 = sphi 0, %s18
      %s21 = sphi 0, %s19
      %s22 = sphi 0, %s20
      %s23 = sphi 0, %s21
      %s33 = sphi 0, %s35
      %s36 = sphi 0, %s33
      %s37 = sphi 0, %s36
      %s53 = sphi 0, %s37
      %s59 = sphi 0, %s61
      %s62 = sphi 0, %s59
      %s63 = sphi 0, %s62
      %s79 = sphi 0, %s63
      %s87 = sphi 0, %s89
      %s90 = sphi 0, %s87
      %s91 = sphi 0, %s90
      %s107 = sphi 0, %s91
    $region4: #{tpu_custom_call.1} parent=1 // loop_header_branch
      %14 = sbr.rel (%p12) target = $region8
    $region5: #{tpu_custom_call.1} parent=1 // loop_body
      %s16 = ssub.s32 %s11, 1
      %s17 = ssub.s32 %s11, 2
      %s24 = sadd.s32 1, %s19
      %p25 = scmp.ge.s32.totalorder %s24, 1
      %s26 = scalar_select %p25, 0, %s24
      %s27 = sadd.s32 1, %s18
      %s28 = scalar_select %p25, %s27, %s18
      %p29 = scmp.ge.s32.totalorder %s28, 2
      %s30 = scalar_select %p29, 0, %s28
      %s31 = ssub.s32 %s18, %s30
      %p32 = scmp.eq.s32.totalorder %s31, 0
      %s34 = sadd.s32 %s33, 1
      %s35 = scalar_select %p32, %s33, %s34
      %p38 = pneg %p32
      %p39 = scmp.eq.s32.totalorder %s11, 1
      %p40 = por %p38, %p39
      %p41 = scmp.ne.s32.totalorder %s33, %s36
      %p42 = scmp.eq.s32.totalorder %s11, 0
      %p43 = por %p41, %p42
      %p44 = scmp.ne.s32.totalorder %s33, %s36
      %p45 = scmp.eq.s32.totalorder %s16, 1
      %p46 = por %p44, %p45
      %p47 = scmp.ne.s32.totalorder %s36, %s37
      %p48 = scmp.eq.s32.totalorder %s16, 0
      %p49 = por %p47, %p48
      %p50 = scmp.ne.s32.totalorder %s36, %s37
      %p51 = scmp.eq.s32.totalorder %s17, 1
      %p52 = por %p50, %p51
      %p54 = scmp.ne.s32.totalorder %s37, %s53
      %p55 = scmp.eq.s32.totalorder %s17, 0
      %p56 = por %p54, %p55
      %s57 = ssub.s32 %s19, %s26
      %p58 = scmp.eq.s32.totalorder %s57, 0
      %s60 = sadd.s32 %s59, 1
      %s61 = scalar_select %p58, %s59, %s60
      %p64 = pneg %p58
      %p65 = scmp.eq.s32.totalorder %s11, 1
      %p66 = por %p64, %p65
      %p67 = scmp.ne.s32.totalorder %s59, %s62
      %p68 = scmp.eq.s32.totalorder %s11, 0
      %p69 = por %p67, %p68
      %p70 = scmp.ne.s32.totalorder %s59, %s62
      %p71 = scmp.eq.s32.totalorder %s16, 1
      %p72 = por %p70, %p71
      %p73 = scmp.ne.s32.totalorder %s62, %s63
      %p74 = scmp.eq.s32.totalorder %s16, 0
      %p75 = por %p73, %p74
      %p76 = scmp.ne.s32.totalorder %s62, %s63
      %p77 = scmp.eq.s32.totalorder %s17, 1
      %p78 = por %p76, %p77
      %p80 = scmp.ne.s32.totalorder %s63, %s79
      %p81 = scmp.eq.s32.totalorder %s17, 0
      %p82 = por %p80, %p81
      %s83 = ssub.s32 %s18, %s30
      %s84 = ssub.s32 %s19, %s26
      %s85 = sor.u32 %s83, %s84
      %p86 = scmp.eq.s32.totalorder %s85, 0
      %s88 = sadd.s32 %s87, 1
      %s89 = scalar_select %p86, %s87, %s88
      %p92 = pneg %p86
      %p93 = scmp.eq.s32.totalorder %s11, 1
      %p94 = por %p92, %p93
      %p95 = scmp.ne.s32.totalorder %s87, %s90
      %p96 = scmp.eq.s32.totalorder %s11, 0
      %p97 = por %p95, %p96
      %p98 = scmp.ne.s32.totalorder %s87, %s90
      %p99 = scmp.eq.s32.totalorder %s16, 1
      %p100 = por %p98, %p99
      %p101 = scmp.ne.s32.totalorder %s90, %s91
      %p102 = scmp.eq.s32.totalorder %s16, 0
      %p103 = por %p101, %p102
      %p104 = scmp.ne.s32.totalorder %s90, %s91
      %p105 = scmp.eq.s32.totalorder %s17, 1
      %p106 = por %p104, %p105
      %p108 = scmp.ne.s32.totalorder %s91, %s107
      %p109 = scmp.eq.s32.totalorder %s17, 0
      %p110 = por %p108, %p109
      %p111 = scmp.le.s32.totalorder 1, %s11
      %p112 = scmp.lt.s32.totalorder %s11, 3
      %p113 = pnand %p111, %p112
      %p114 = pneg %p113
      // Predicated region
      $region9: #{tpu_custom_call.1} parent=5 // pred_check
        _
      $region10: #{tpu_custom_call.1} parent=5 // pred_check_branch
        %116 = sbr.rel (%p113) target = $region12
      $region11: #{tpu_custom_call.1} parent=5 // pred_region
        %s117 = ssub.s32 %s11, 1
        // Predicated region
        $region13: #{tpu_custom_call.1} parent=11 // pred_check
          %p118 = pneg %p75
        $region14: #{tpu_custom_call.1} parent=11 // pred_check_branch
          %120 = sbr.rel (%p118) target = $region16
        $region15: #{tpu_custom_call.1} parent=11 // pred_region
          %s121 = smul.u32 32, %s21
          %s122 = ssub.s32 25, %s121
          %s123 = smul.u32 128, %s122
          %p124 = scmp.lt.s32.totalorder %s121, 24
          %s125 = scalar_select %p124, %s121, 24
          %s126 = smul.addr %s125, 8
          %s127 = scalar_lea.vmem %s1, %s126
          %s128 = smul.u32 32, %s21
          %s129 = ssub.s32 25, %s128
          %s130 = smul.u32 128, %s129
        $region16: #{tpu_custom_call.1} parent=11 // pred_fallthru
          _
      $region12: #{tpu_custom_call.1} parent=5 // pred_fallthru
        _
      %p131 = scmp.lt.s32.totalorder %s11, 2
      // Predicated region
      $region17: #{tpu_custom_call.1} parent=5 // pred_check
        %p132 = pneg %p131
      $region18: #{tpu_custom_call.1} parent=5 // pred_check_branch
        %134 = sbr.rel (%p132) target = $region20
      $region19: #{tpu_custom_call.1} parent=5 // pred_region
        // Predicated region
        $region21: #{tpu_custom_call.1} parent=19 // pred_check
          %p135 = pneg %p43
        $region22: #{tpu_custom_call.1} parent=19 // pred_check_branch
          %137 = sbr.rel (%p135) target = $region24
        $region23: #{tpu_custom_call.1} parent=19 // pred_region
          %s138 = smul.u32 13, %s18
          %s139 = ssub.s32 25, %s138
          %p140 = scmp.lt.s32.totalorder %s139, 13
          %s141 = scalar_select %p140, %s139, 13
          %s142 = smul.u32 128, %s141
          %p143 = scmp.lt.s32.totalorder %s138, 24
          %s144 = scalar_select %p143, %s138, 24
          %s145 = smul.addr %s144, 8
          %s146 = scalar_lea.vmem %s0, %s145
          %s147 = smul.u32 13, %s18
          %s148 = ssub.s32 25, %s147
          %p149 = scmp.lt.s32.totalorder %s148, 13
          %s150 = scalar_select %p149, %s148, 13
          %s151 = smul.u32 128, %s150
        $region24: #{tpu_custom_call.1} parent=19 // pred_fallthru
          _
      $region20: #{tpu_custom_call.1} parent=5 // pred_fallthru
        _
      %p152 = scmp.le.s32.totalorder 1, %s11
      %p153 = scmp.lt.s32.totalorder %s11, 3
      %p154 = pnand %p152, %p153
      %p155 = pneg %p154
      // Predicated region
      $region25: #{tpu_custom_call.1} parent=5 // pred_check
        _
      $region26: #{tpu_custom_call.1} parent=5 // pred_check_branch
        %157 = sbr.rel (%p154) target = $region28
      $region27: #{tpu_custom_call.1} parent=5 // pred_region
        %s158 = ssub.s32 %s11, 1
        %s159 = smul.u32 13, %s20
        %s160 = ssub.s32 25, %s159
        %p161 = scmp.lt.s32.totalorder %s160, 13
        %s162 = scalar_select %p161, %s160, 13
        %s163 = smul.u32 128, %s162
        %p164 = scmp.lt.s32.totalorder %s159, 24
        %s165 = scalar_select %p164, %s159, 24
        %s166 = smul.addr %s165, 8
        %s167 = scalar_lea.vmem %s0, %s166
        %p168 = pneg %p49
        %p169 = pneg %p46
        %s170 = smul.u32 32, %s21
        %s171 = ssub.s32 25, %s170
        %s172 = smul.u32 128, %s171
        %p173 = scmp.lt.s32.totalorder %s170, 24
        %s174 = scalar_select %p173, %s170, 24
        %s175 = smul.addr %s174, 8
        %s176 = scalar_lea.vmem %s1, %s175
        %p177 = pneg %p75
        %p178 = pneg %p72
        %p179 = pneg %p103
        %p180 = pneg %p100
        %s181 = sand.u32 %s90, 1
        %s182 = scalar_lea.sflag [#allocation3], %s181
        %s183 = sand.u32 %s90, 1
        %s184 = smul.addr %s183, 208
        %s185 = scalar_lea.vmem [#allocation2], %s184
        %s186 = smul.u32 13, %s20
        %s187 = ssub.s32 25, %s186
        %p188 = scmp.lt.s32.totalorder %s187, 13
        %s189 = scalar_select %p188, %s187, 13
        %s190 = smul.u32 128, %s189
        %p191 = scmp.lt.s32.totalorder %s186, 24
        %s192 = scalar_select %p191, %s186, 24
        %s193 = smul.addr %s192, 8
        %s194 = scalar_lea.vmem %s0, %s193
        %s195 = smul.u32 13, %s20
        %s196 = ssub.s32 25, %s195
        %p197 = scmp.lt.s32.totalorder %s196, 13
        %s198 = scalar_select %p197, %s196, 13
        %s199 = smul.u32 128, %s198
        %s200 = smul.u32 32, %s21
        %s201 = ssub.s32 25, %s200
        %s202 = smul.u32 128, %s201
        %p203 = scmp.lt.s32.totalorder %s200, 24
        %s204 = scalar_select %p203, %s200, 24
        %s205 = smul.addr %s204, 8
        %s206 = scalar_lea.vmem %s1, %s205
        %s207 = smul.u32 32, %s21
        %s208 = ssub.s32 25, %s207
        %s209 = smul.u32 128, %s208
        %s210 = smul.u32 13, %s20
        %s211 = smul.u32 2, %s21
        %s212 = ssub.s32 25, %s210
        %p213 = scmp.lt.s32.totalorder %s212, 13
        %s214 = scalar_select %p213, %s212, 13
        %s215 = smul.u32 128, %s214
        %s216 = smul.u32 %s215, 2
        %v217 = vld [vmem:[%s194] sm:$0xff]
        %v218 = vld [vmem:[%s194 + $0x8] sm:$0xff]
        %v219 = vld [vmem:[%s194 + $0x10] sm:$0xff]
        %v220 = vld [vmem:[%s194 + $0x18] sm:$0xff]
        %v221 = vld [vmem:[%s194 + $0x20] sm:$0xff]
        %v222 = vld [vmem:[%s194 + $0x28] sm:$0xff]
        %v223 = vld [vmem:[%s194 + $0x30] sm:$0xff]
        %v224 = vld [vmem:[%s194 + $0x38] sm:$0xff]
        %v225 = vld [vmem:[%s194 + $0x40] sm:$0xff]
        %v226 = vld [vmem:[%s194 + $0x48] sm:$0xff]
        %v227 = vld [vmem:[%s194 + $0x50] sm:$0xff]
        %v228 = vld [vmem:[%s194 + $0x58] sm:$0xff]
        %v229 = vld [vmem:[%s194 + $0x60] sm:$0xff]
        %v230 = vld [vmem:[%s206] sm:$0xff]
        %v231 = vld [vmem:[%s206 + $0x8] sm:$0xff]
        %v232 = vld [vmem:[%s206 + $0x10] sm:$0xff]
        %v233 = vld [vmem:[%s206 + $0x18] sm:$0xff]
        %v234 = vld [vmem:[%s206 + $0x20] sm:$0xff]
        %v235 = vld [vmem:[%s206 + $0x28] sm:$0xff]
        %v236 = vld [vmem:[%s206 + $0x30] sm:$0xff]
        %v237 = vld [vmem:[%s206 + $0x38] sm:$0xff]
        %v238 = vld [vmem:[%s206 + $0x40] sm:$0xff]
        %v239 = vld [vmem:[%s206 + $0x48] sm:$0xff]
        %v240 = vld [vmem:[%s206 + $0x50] sm:$0xff]
        %v241 = vld [vmem:[%s206 + $0x58] sm:$0xff]
        %v242 = vld [vmem:[%s206 + $0x60] sm:$0xff]
        %v243 = vld [vmem:[%s206 + $0x68] sm:$0xff]
        %v244 = vld [vmem:[%s206 + $0x70] sm:$0xff]
        %v245 = vld [vmem:[%s206 + $0x78] sm:$0xff]
        %v246 = vld [vmem:[%s206 + $0x80] sm:$0xff]
        %v247 = vld [vmem:[%s206 + $0x88] sm:$0xff]
        %v248 = vld [vmem:[%s206 + $0x90] sm:$0xff]
        %v249 = vld [vmem:[%s206 + $0x98] sm:$0xff]
        %v250 = vld [vmem:[%s206 + $0xa0] sm:$0xff]
        %v251 = vld [vmem:[%s206 + $0xa8] sm:$0xff]
        %v252 = vld [vmem:[%s206 + $0xb0] sm:$0xff]
        %v253 = vld [vmem:[%s206 + $0xb8] sm:$0xff]
        %v254 = vld [vmem:[%s206 + $0xc0] sm:$0xff]
        %v255 = vld [vmem:[%s206 + $0xc8] sm:$0xff]
        %v256 = vld [vmem:[%s206 + $0xd0] sm:$0xff]
        %v257 = vld [vmem:[%s206 + $0xd8] sm:$0xff]
        %v258 = vld [vmem:[%s206 + $0xe0] sm:$0xff]
        %v259 = vld [vmem:[%s206 + $0xe8] sm:$0xff]
        %v260 = vld [vmem:[%s206 + $0xf0] sm:$0xff]
        %v261 = vld [vmem:[%s206 + $0xf8] sm:$0xff]
        %vm262 = vcmask 261120
        %v264 = vsel %vm262, %v217, 0
        %v267 = vsel %vm262, %v218, 0
        %v270 = vsel %vm262, %v219, 0
        %v273 = vsel %vm262, %v220, 0
        %v276 = vsel %vm262, %v221, 0
        %v279 = vsel %vm262, %v222, 0
        %v282 = vsel %vm262, %v223, 0
        %v285 = vsel %vm262, %v224, 0
        %v288 = vsel %vm262, %v225, 0
        %v291 = vsel %vm262, %v226, 0
        %v294 = vsel %vm262, %v227, 0
        %v297 = vsel %vm262, %v228, 0
        %v300 = vsel %vm262, %v229, 0
        %v303 = vsel %vm262, %v230, 0
        %v306 = vsel %vm262, %v231, 0
        %v309 = vsel %vm262, %v232, 0
        %v312 = vsel %vm262, %v233, 0
        %v315 = vsel %vm262, %v234, 0
        %v318 = vsel %vm262, %v235, 0
        %v321 = vsel %vm262, %v236, 0
        %v324 = vsel %vm262, %v237, 0
        %v327 = vsel %vm262, %v238, 0
        %v330 = vsel %vm262, %v239, 0
        %v333 = vsel %vm262, %v240, 0
        %v336 = vsel %vm262, %v241, 0
        %v339 = vsel %vm262, %v242, 0
        %v342 = vsel %vm262, %v243, 0
        %v345 = vsel %vm262, %v244, 0
        %v348 = vsel %vm262, %v245, 0
        %v351 = vsel %vm262, %v246, 0
        %v354 = vsel %vm262, %v247, 0
        %v357 = vsel %vm262, %v248, 0
        %v360 = vsel %vm262, %v249, 0
        %v363 = vsel %vm262, %v250, 0
        %v366 = vsel %vm262, %v251, 0
        %v369 = vsel %vm262, %v252, 0
        %v372 = vsel %vm262, %v253, 0
        %v375 = vsel %vm262, %v254, 0
        %v378 = vsel %vm262, %v255, 0
        %v381 = vsel %vm262, %v256, 0
        %v384 = vsel %vm262, %v257, 0
        %v387 = vsel %vm262, %v258, 0
        %v390 = vsel %vm262, %v259, 0
        %v393 = vsel %vm262, %v260, 0
        %v396 = vsel %vm262, %v261, 0
        %398 = vmatprep.subr.mxu0 0.0
        %399 = vmatpush1.xpose.msra.mxu0 %v303
        %400 = vmatprep.subr.mxu0 0.0
        %401 = vmatpush1.xpose.msra.mxu0 %v306
        %402 = vmatprep.subr.mxu0 0.0
        %403 = vmatpush1.xpose.msra.mxu0 %v309
        %404 = vmatprep.subr.mxu0 0.0
        %405 = vmatpush1.xpose.msra.mxu0 %v312
        %406 = vmatprep.subr.mxu0 0.0
        %407 = vmatpush1.xpose.msra.mxu0 %v315
        %408 = vmatprep.subr.mxu0 0.0
        %409 = vmatpush1.xpose.msra.mxu0 %v318
        %410 = vmatprep.subr.mxu0 0.0
        %411 = vmatpush1.xpose.msra.mxu0 %v321
        %412 = vmatprep.subr.mxu0 0.0
        %413 = vmatpush1.xpose.msra.mxu0 %v324
        %414 = vmatprep.subr.mxu0 0.0
        %415 = vmatpush1.xpose.msra.mxu0 %v327
        %416 = vmatprep.subr.mxu0 0.0
        %417 = vmatpush1.xpose.msra.mxu0 %v330
        %418 = vmatprep.subr.mxu0 0.0
        %419 = vmatpush1.xpose.msra.mxu0 %v333
        %420 = vmatprep.subr.mxu0 0.0
        %421 = vmatpush1.xpose.msra.mxu0 %v336
        %422 = vmatprep.subr.mxu0 0.0
        %423 = vmatpush1.xpose.msra.mxu0 %v339
        %424 = vmatprep.subr.mxu0 0.0
        %425 = vmatpush1.xpose.msra.mxu0 %v342
        %426 = vmatprep.subr.mxu0 0.0
        %427 = vmatpush1.xpose.msra.mxu0 %v345
        %428 = vmatprep.subr.mxu0 0.0
        %429 = vmatpush1.xpose.msra.mxu0 %v348
        %430 = vmatprep.subr.mxu0 0.0
        %431 = vmatpush1.xpose.msra.mxu0 %v351
        %432 = vmatprep.subr.mxu0 0.0
        %433 = vmatpush1.xpose.msra.mxu0 %v354
        %434 = vmatprep.subr.mxu0 0.0
        %435 = vmatpush1.xpose.msra.mxu0 %v357
        %436 = vmatprep.subr.mxu0 0.0
        %437 = vmatpush1.xpose.msra.mxu0 %v360
        %438 = vmatprep.subr.mxu0 0.0
        %439 = vmatpush1.xpose.msra.mxu0 %v363
        %440 = vmatprep.subr.mxu0 0.0
        %441 = vmatpush1.xpose.msra.mxu0 %v366
        %442 = vmatprep.subr.mxu0 0.0
        %443 = vmatpush1.xpose.msra.mxu0 %v369
        %444 = vmatprep.subr.mxu0 0.0
        %445 = vmatpush1.xpose.msra.mxu0 %v372
        %446 = vmatprep.subr.mxu0 0.0
        %447 = vmatpush1.xpose.msra.mxu0 %v375
        %448 = vmatprep.subr.mxu0 0.0
        %449 = vmatpush1.xpose.msra.mxu0 %v378
        %450 = vmatprep.subr.mxu0 0.0
        %451 = vmatpush1.xpose.msra.mxu0 %v381
        %452 = vmatprep.subr.mxu0 0.0
        %453 = vmatpush1.xpose.msra.mxu0 %v384
        %454 = vmatprep.subr.mxu0 0.0
        %455 = vmatpush1.xpose.msra.mxu0 %v387
        %456 = vmatprep.subr.mxu0 0.0
        %457 = vmatpush1.xpose.msra.mxu0 %v390
        %458 = vmatprep.subr.mxu0 0.0
        %459 = vmatpush1.xpose.msra.mxu0 %v393
        %460 = vmatprep.subr.mxu0 0.0
        %461 = vmatpush1.xpose.msra.mxu0 %v396
        %462 = vmatprep.mubr.f32.mxu0 0.0
        %463 = vmatmul.mubr.f32.gmra.mrb[0].mxu0 %v264
        %v464 = vpop.f32.mrb[0].mxu0
        %v465 = vadd.f32 0.0, %v464
        %v466 = vpop.f32.mrb[0].mxu0
        %v467 = vadd.f32 0.0, %v466
        %468 = vmatprep.mubr.f32.mxu0 0.0
        %469 = vmatmul.mubr.f32.gmra.mrb[0].mxu0 %v267
        %v470 = vpop.f32.mrb[0].mxu0
        %v471 = vadd.f32 0.0, %v470
        %v472 = vpop.f32.mrb[0].mxu0
        %v473 = vadd.f32 0.0, %v472
        %474 = vmatprep.mubr.f32.mxu0 0.0
        %475 = vmatmul.mubr.f32.gmra.mrb[0].mxu0 %v270
        %v476 = vpop.f32.mrb[0].mxu0
        %v477 = vadd.f32 0.0, %v476
        %v478 = vpop.f32.mrb[0].mxu0
        %v479 = vadd.f32 0.0, %v478
        %480 = vmatprep.mubr.f32.mxu0 0.0
        %481 = vmatmul.mubr.f32.gmra.mrb[0].mxu0 %v273
        %v482 = vpop.f32.mrb[0].mxu0
        %v483 = vadd.f32 0.0, %v482
        %v484 = vpop.f32.mrb[0].mxu0
        %v485 = vadd.f32 0.0, %v484
        %486 = vmatprep.mubr.f32.mxu0 0.0
        %487 = vmatmul.mubr.f32.gmra.mrb[0].mxu0 %v276
        %v488 = vpop.f32.mrb[0].mxu0
        %v489 = vadd.f32 0.0, %v488
        %v490 = vpop.f32.mrb[0].mxu0
        %v491 = vadd.f32 0.0, %v490
        %492 = vmatprep.mubr.f32.mxu0 0.0
        %493 = vmatmul.mubr.f32.gmra.mrb[0].mxu0 %v279
        %v494 = vpop.f32.mrb[0].mxu0
        %v495 = vadd.f32 0.0, %v494
        %v496 = vpop.f32.mrb[0].mxu0
        %v497 = vadd.f32 0.0, %v496
        %498 = vmatprep.mubr.f32.mxu0 0.0
        %499 = vmatmul.mubr.f32.gmra.mrb[0].mxu0 %v282
        %v500 = vpop.f32.mrb[0].mxu0
        %v501 = vadd.f32 0.0, %v500
        %v502 = vpop.f32.mrb[0].mxu0
        %v503 = vadd.f32 0.0, %v502
        %504 = vmatprep.mubr.f32.mxu0 0.0
        %505 = vmatmul.mubr.f32.gmra.mrb[0].mxu0 %v285
        %v506 = vpop.f32.mrb[0].mxu0
        %v507 = vadd.f32 0.0, %v506
        %v508 = vpop.f32.mrb[0].mxu0
        %v509 = vadd.f32 0.0, %v508
        %510 = vmatprep.mubr.f32.mxu0 0.0
        %511 = vmatmul.mubr.f32.gmra.mrb[0].mxu0 %v288
        %v512 = vpop.f32.mrb[0].mxu0
        %v513 = vadd.f32 0.0, %v512
        %v514 = vpop.f32.mrb[0].mxu0
        %v515 = vadd.f32 0.0, %v514
        %516 = vmatprep.mubr.f32.mxu0 0.0
        %517 = vmatmul.mubr.f32.gmra.mrb[0].mxu0 %v291
        %v518 = vpop.f32.mrb[0].mxu0
        %v519 = vadd.f32 0.0, %v518
        %v520 = vpop.f32.mrb[0].mxu0
        %v521 = vadd.f32 0.0, %v520
        %522 = vmatprep.mubr.f32.mxu0 0.0
        %523 = vmatmul.mubr.f32.gmra.mrb[0].mxu0 %v294
        %v524 = vpop.f32.mrb[0].mxu0
        %v525 = vadd.f32 0.0, %v524
        %v526 = vpop.f32.mrb[0].mxu0
        %v527 = vadd.f32 0.0, %v526
        %528 = vmatprep.mubr.f32.mxu0 0.0
        %529 = vmatmul.mubr.f32.gmra.mrb[0].mxu0 %v297
        %v530 = vpop.f32.mrb[0].mxu0
        %v531 = vadd.f32 0.0, %v530
        %v532 = vpop.f32.mrb[0].mxu0
        %v533 = vadd.f32 0.0, %v532
        %534 = vmatprep.mubr.f32.mxu0 0.0
        %535 = vmatmul.mubr.f32.gmra.mrb[0].mxu0 %v300
        %v536 = vpop.f32.mrb[0].mxu0
        %v537 = vadd.f32 0.0, %v536
        %v538 = vpop.f32.mrb[0].mxu0
        %v539 = vadd.f32 0.0, %v538
        %540 = vdwg.mxu0
        %541 = vst [vmem:[%s185] sm:$0xff] %v465
        %542 = vst [vmem:[%s185 + $0x8] sm:$0xff] %v467
        %543 = vst [vmem:[%s185 + $0x10] sm:$0xff] %v471
        %544 = vst [vmem:[%s185 + $0x18] sm:$0xff] %v473
        %545 = vst [vmem:[%s185 + $0x20] sm:$0xff] %v477
        %546 = vst [vmem:[%s185 + $0x28] sm:$0xff] %v479
        %547 = vst [vmem:[%s185 + $0x30] sm:$0xff] %v483
        %548 = vst [vmem:[%s185 + $0x38] sm:$0xff] %v485
        %549 = vst [vmem:[%s185 + $0x40] sm:$0xff] %v489
        %550 = vst [vmem:[%s185 + $0x48] sm:$0xff] %v491
        %551 = vst [vmem:[%s185 + $0x50] sm:$0xff] %v495
        %552 = vst [vmem:[%s185 + $0x58] sm:$0xff] %v497
        %553 = vst [vmem:[%s185 + $0x60] sm:$0xff] %v501
        %554 = vst [vmem:[%s185 + $0x68] sm:$0xff] %v503
        %555 = vst [vmem:[%s185 + $0x70] sm:$0xff] %v507
        %556 = vst [vmem:[%s185 + $0x78] sm:$0xff] %v509
        %557 = vst [vmem:[%s185 + $0x80] sm:$0xff] %v513
        %558 = vst [vmem:[%s185 + $0x88] sm:$0xff] %v515
        %559 = vst [vmem:[%s185 + $0x90] sm:$0xff] %v519
        %560 = vst [vmem:[%s185 + $0x98] sm:$0xff] %v521
        %561 = vst [vmem:[%s185 + $0xa0] sm:$0xff] %v525
        %562 = vst [vmem:[%s185 + $0xa8] sm:$0xff] %v527
        %563 = vst [vmem:[%s185 + $0xb0] sm:$0xff] %v531
        %564 = vst [vmem:[%s185 + $0xb8] sm:$0xff] %v533
        %565 = vst [vmem:[%s185 + $0xc0] sm:$0xff] %v537
        %566 = vst [vmem:[%s185 + $0xc8] sm:$0xff] %v539
        %s567 = sand.u32 %s90, 1
        %s568 = scalar_lea.sflag [#allocation3], %s567
        %s569 = sand.u32 %s90, 1
        %s570 = smul.addr %s569, 208
        %s571 = scalar_lea.vmem [#allocation2], %s570
        // Predicated region
        $region29: #{tpu_custom_call.1} parent=27 // pred_check
          %p572 = pneg %p100
        $region30: #{tpu_custom_call.1} parent=27 // pred_check_branch
          %574 = sbr.rel (%p572) target = $region32
        $region31: #{tpu_custom_call.1} parent=27 // pred_region
          %s575 = smul.u32 13, %s20
          %s576 = smul.u32 2, %s21
          %s577 = ssub.s32 25, %s575
          %p578 = scmp.lt.s32.totalorder %s577, 13
          %s579 = scalar_select %p578, %s577, 13
          %s580 = smul.u32 128, %s579
          %s581 = smul.u32 %s580, 2
          %s583 = ssub.s32 3328, %s581
          %584 = vsyncadd %s568, %s583
          %p585 = scmp.ne.s32.totalorder 0, %s581
          %s586 = smul.addr %s575, 2
          %s587 = sadd.s32 %s576, %s586
          %s588 = smul.addr %s587, 128
          %s589 = scalar_lea.hbm %s2, %s588
          %s590 = smul.u32 16, %s579
          %s591 = sshll.u32 %s571, 4
          %s592 = int_to_ptr.vmem [resolvable:$true] %s591
          %s593 = sshll.u32 %s590, 4
          %597 = dma.vmem_to_hbm [thread:$0]  (%p585), %s592, %s593, %s589, %s568, 256, 256, 16
        $region32: #{tpu_custom_call.1} parent=27 // pred_fallthru
          _
      $region28: #{tpu_custom_call.1} parent=5 // pred_fallthru
        _
      %p598 = scmp.le.s32.totalorder 2, %s11
      // Predicated region
      $region33: #{tpu_custom_call.1} parent=5 // pred_check
        %p599 = pneg %p598
      $region34: #{tpu_custom_call.1} parent=5 // pred_check_branch
        %601 = sbr.rel (%p599) target = $region36
      $region35: #{tpu_custom_call.1} parent=5 // pred_region
        %s602 = ssub.s32 %s11, 2
        // Predicated region
        $region37: #{tpu_custom_call.1} parent=35 // pred_check
          %p603 = pneg %p106
        $region38: #{tpu_custom_call.1} parent=35 // pred_check_branch
          %605 = sbr.rel (%p603) target = $region40
        $region39: #{tpu_custom_call.1} parent=35 // pred_region
          %s606 = sand.u32 %s91, 1
          %s607 = scalar_lea.sflag [#allocation3], %s606
          %s608 = sand.u32 %s91, 1
          %s609 = smul.addr %s608, 208
          %s610 = scalar_lea.vmem [#allocation2], %s609
          %611 = dma.done %s607, 3328
        $region40: #{tpu_custom_call.1} parent=35 // pred_fallthru
          _
      $region36: #{tpu_custom_call.1} parent=5 // pred_fallthru
        _
    $region6: #{tpu_custom_call.1} parent=1 // loop_footer
      %s15 = sadd.s32 1, %s11
    $region7: #{tpu_custom_call.1} parent=1 // loop_footer_branch
      %10 = sbr.rel target = $region3
    $region8: #{tpu_custom_call.1} parent=1 // loop_exit
      _
    %612 = vsyncpa [#allocation3], 1
    %s613 = scalar_lea.sflag [#allocation3], 1
    %614 = vsyncpa %s613, 1

</llo_original>
